<compile_context>
chip_gen: v5e
topology: v5e:2x2
jax: 0.10.0
libtpu: 0.0.40
codegen_flags: <defaults>
</compile_context>

<pallas_src>
import functools
import math

import jax
import jax.numpy as jnp
from jax.experimental import pallas as pl
from jax.experimental.pallas import tpu as pltpu


def _round_up(v, m):
    return ((v + m - 1) // m) * m


def _choose_tile(dim, max_tile=1024):
    """Lane-aligned channel tile + padded extent for a contraction/output dim."""
    if dim <= max_tile:
        return dim, dim
    padded = _round_up(dim, 128)
    for t in range(max_tile, 0, -128):
        if padded % t == 0:
            return t, padded
    return max_tile, _round_up(dim, max_tile)


def _choose_out_tile(dim, max_tile=1024):
    """Like _choose_tile, but keeps >=2 Dout tiles when feasible (v7x dual-TC)."""
    t, p = _choose_tile(dim, max_tile)
    if p // t == 1 and t % 256 == 0:
        t //= 2
    return t, p


# ----------------------------------------------------------------------------
# Kernel 1: token "importance" sums.
#   sums_i = sum_j <x_i/||x_i||, x_j/||x_j||> = <xn_i, sum_j xn_j>
# Softmax is intentionally omitted: it is monotone, so top-k ordering is identical.
# Output is lane-dense: shape (1, N).
# ----------------------------------------------------------------------------
def _sums_kernel(x_ref, s_ref):
    x = x_ref[...].astype(jnp.float32)                          # (N, D)
    norm = jnp.sqrt(jnp.sum(x * x, axis=-1, keepdims=True))     # (N, 1)
    xn = x / jnp.maximum(norm, 1e-12)                           # F.normalize semantics
    colsum = jnp.sum(xn, axis=0, keepdims=True)                 # (1, D)  sum of all rows
    # sums = colsum @ xn.T  -> lane-dense (1, N); avoids an (N, N) intermediate.
    sums = jax.lax.dot_general(colsum, xn, (((1,), (1,)), ((), ())),
                               preferred_element_type=jnp.float32)
    s_ref[...] = sums.astype(s_ref.dtype)


def token_importance_sums(x_2d):
    """x_2d: (N, D) float32 -> sums (N,) float32 (same ordering as torch probas)."""
    n, d = x_2d.shape
    out = pl.pallas_call(
        _sums_kernel,
        out_shape=jax.ShapeDtypeStruct((1, n), jnp.float32),
        grid=(1,),
        in_specs=[pl.BlockSpec((n, d), lambda i: (0, 0))],
        out_specs=pl.BlockSpec((1, n), lambda i: (0, 0)),
    )(x_2d)
    return out[0]


# ----------------------------------------------------------------------------
# Kernel 2: tiled linear layer  y = x @ w_t + b  (+ optional exact GELU).
#   w_t stored pre-transposed (Din, Dout): contraction dim leading, no in-kernel .T.
# ----------------------------------------------------------------------------
def _linear_kernel(x_ref, w_ref, b_ref, o_ref, acc_ref, *, apply_gelu):
    kk = pl.program_id(2)

    @pl.when(kk == 0)
    def _():
        acc_ref[...] = jnp.zeros_like(acc_ref)

    acc_ref[...] += jnp.dot(x_ref[...], w_ref[...],
                            preferred_element_type=jnp.float32)

    @pl.when(kk == pl.num_programs(2) - 1)
    def _():
        out = acc_ref[...] + b_ref[...].astype(jnp.float32)
        if apply_gelu:
            # exact (erf-based) GELU, matching torch.nn.GELU default
            out = 0.5 * out * (1.0 + jax.lax.erf(out * (1.0 / math.sqrt(2.0))))
        o_ref[...] = out.astype(o_ref.dtype)


def prepare_linear_layer(w, b):
    """w: (Dout, Din) torch layout f32, b: (Dout,) f32.
    Pre-transpose, pre-pad to the tile grid and pre-cast to bf16 ONCE."""
    dout, din = w.shape
    tk, kp = _choose_tile(din)
    tn, np_ = _choose_out_tile(dout)
    w_t = jnp.transpose(w)                                      # (Din, Dout)
    if (kp, np_) != (din, dout):
        w_t = jnp.pad(w_t, ((0, kp - din), (0, np_ - dout)))
    b_p = b.reshape(1, -1)
    if np_ != dout:
        b_p = jnp.pad(b_p, ((0, 0), (0, np_ - dout)))
    return {
        "w_t": w_t.astype(jnp.bfloat16),
        "b": b_p.astype(jnp.float32),
        "din": din, "dout": dout, "tk": tk, "tn": tn,
    }


def linear_pallas(x, layer, *, apply_gelu, out_dtype):
    """x: (M, Din) -> (M, Dout).  Weights already padded / bf16 in `layer`."""
    m, din = x.shape
    assert din == layer["din"]
    w_t, b = layer["w_t"], layer["b"]
    kp, np_ = w_t.shape
    tk, tn = layer["tk"], layer["tn"]
    dout = layer["dout"]

    # Full-M token tile: the grid's i-axis collapses to 1 so each weight tile is
    # streamed from HBM exactly once per layer.  Fall back to 512-row stripes only
    # for very large M (keeps acc/out tiles small enough for v7x VMEM).
    mp = _round_up(m, 16)
    if mp <= 1024:
        tm = mp
    else:
        tm = 512
        mp = _round_up(m, tm)

    xp = x
    if (mp, kp) != (m, din):
        xp = jnp.pad(x, ((0, mp - m), (0, kp - din)))
    xp = xp.astype(jnp.bfloat16)       # bf16 MXU operands, f32 accumulation

    out_itemsize = jnp.dtype(out_dtype).itemsize
    vmem_bytes = (2 * tm * tk * 2          # double-buffered x tile (bf16)
                  + 2 * tk * tn * 2        # double-buffered w tile (bf16)
                  + 2 * tn * 4             # bias
                  + 2 * tm * tn * out_itemsize   # double-buffered out tile
                  + tm * tn * 4)           # f32 acc scratch
    # Clamp under v7x's 64 MiB per-TC VMEM with headroom; raises v5e's 16 MiB default.
    vmem_limit = int(min(max(vmem_bytes + (8 << 20), 32 << 20), 56 << 20))

    out = pl.pallas_call(
        functools.partial(_linear_kernel, apply_gelu=apply_gelu),
        out_shape=jax.ShapeDtypeStruct((mp, np_), out_dtype),
        grid_spec=pltpu.PrefetchScalarGridSpec(
            num_scalar_prefetch=0,
            grid=(mp // tm, np_ // tn, kp // tk),
            in_specs=[
                pl.BlockSpec((tm, tk), lambda i, j, k: (i, k)),
                pl.BlockSpec((tk, tn), lambda i, j, k: (k, j)),
                pl.BlockSpec((1, tn), lambda i, j, k: (0, j)),
            ],
            out_specs=pl.BlockSpec((tm, tn), lambda i, j, k: (i, j)),
            scratch_shapes=[pltpu.VMEM((tm, tn), jnp.float32)],
        ),
        compiler_params=pltpu.CompilerParams(
            dimension_semantics=("parallel", "parallel", "arbitrary"),
            vmem_limit_bytes=vmem_limit,
        ),
    )(xp, w_t, b)

    if (mp, np_) != (m, dout):
        out = out[:m, :dout]
    return out


def mlp_forward(xk, layer1, layer2):
    """xk: (K, D) -> (K, H).  Linear -> GELU(exact) -> Linear."""
    # Layer-1 output kept bf16 (layer-2 MXU operands are bf16 anyway).
    h = linear_pallas(xk, layer1, apply_gelu=True, out_dtype=jnp.bfloat16)
    return linear_pallas(h, layer2, apply_gelu=False, out_dtype=jnp.float32)


# ----------------------------------------------------------------------------
# Full module forward.  `num_keep` (= int(clamp(alpha,0.4,1.0) * N)) is computed
# ONCE by the caller (hoisted host sync), not per forward.
# ----------------------------------------------------------------------------
def token_drop_mlp_forward(x, params, num_keep):
    """x: (1, N, D) float32; returns (1, num_keep, hidden_size)."""
    assert x.shape[0] == 1, "torch code's indices.squeeze() implies batch == 1"
    x2d = x[0]                                                  # (N, D)

    sums = token_importance_sums(x2d)                           # (N,)
    # softmax is monotone + uniform rescale -> same top-k ordering as probas.
    # TODO(synk): data-dependent top-k + row gather have no clean static Pallas
    # form (k depends on alpha); they stay in plain JAX/XLA.
    _, indices = jax.lax.top_k(-sums, num_keep)                 # num_keep smallest
    x_sel = jnp.take(x2d, indices, axis=0)                      # index_select along -2

    y = mlp_forward(x_sel, params["layer1"], params["layer2"])
    return y[None]                                              # (1, K, hidden_size)


def compute_num_keep(params, n_tokens):
    """alpha.data.clamp_(0.4, 1.0); k = int(alpha * N) — done once, host-side."""
    alpha = float(jnp.clip(params["alpha"], 0.4, 1.0)[0])
    return int(alpha * n_tokens)


# ----------------------------------------------------------------------------
# Deterministic parameter init (mlp_depth = 2), weights stored pre-transposed,
# pre-padded and pre-cast to bf16 (done once, not per forward).
# ----------------------------------------------------------------------------
def init_params(key, mm_hidden_size, hidden_size):
    k_alpha, k_w1, k_b1, k_w2, k_b2 = jax.random.split(key, 5)
    w1 = jax.random.normal(k_w1, (hidden_size, mm_hidden_size), jnp.float32) * 0.02
    b1 = jax.random.normal(k_b1, (hidden_size,), jnp.float32) * 0.02
    w2 = jax.random.normal(k_w2, (hidden_size, hidden_size), jnp.float32) * 0.02
    b2 = jax.random.normal(k_b2, (hidden_size,), jnp.float32) * 0.02
    return {
        "alpha": jax.random.normal(k_alpha, (1,), jnp.float32),
        "layer1": prepare_linear_layer(w1, b1),
        "layer2": prepare_linear_layer(w2, b2),
    }


if __name__ == "__main__":
    # Small shapes consistent with the module: batch=1, N=8 tokens,
    # mm_hidden_size=32, hidden_size=32, mlp_depth=2.
    N, MM_HIDDEN, HIDDEN = 8, 32, 32
    key = jax.random.PRNGKey(0)
    kx, kp = jax.random.split(key)
    x = jax.random.normal(kx, (1, N, MM_HIDDEN), jnp.float32)
    params = init_params(kp, MM_HIDDEN, HIDDEN)

    # alpha clamp / k computation hoisted out of the per-call forward path.
    k = compute_num_keep(params, N)

    y = token_drop_mlp_forward(x, params, k)
    jax.block_until_ready(y)

    assert y.shape == (1, k, HIDDEN), y.shape
    assert bool(jnp.all(jnp.isfinite(y)))
    print("KERNEL_OK")
</pallas_src>

<mosaic_0001>
module attributes {stable_mosaic.version = 11 : i64} {
  func.func @_sums_kernel(%arg0: i32, %arg1: memref<8x32xf32, #tpu.memory_space<vmem>>, %arg2: memref<1x8xf32, #tpu.memory_space<vmem>>) attributes {dimension_semantics = [#tpu.dimension_semantics<arbitrary>], iteration_bounds = array<i64: 1>, scalar_prefetch = 0 : i64, scratch_operands = 0 : i64, tpu.core_type = #tpu.core_type<tc>, window_params = [{pipeline_mode = #tpu.pipeline_mode<synchronous>, transform_indices = @transform_0, window_bounds = array<i64: 8, 32>}, {pipeline_mode = #tpu.pipeline_mode<synchronous>, transform_indices = @transform_1, window_bounds = array<i64: 1, 8>}]} {
    %c0 = arith.constant 0 : index
    %c0_0 = arith.constant 0 : index
    %0 = vector.load %arg1[%c0, %c0_0] : memref<8x32xf32, #tpu.memory_space<vmem>>, vector<8x32xf32>
    %1 = arith.mulf %0, %0 : vector<8x32xf32>
    %cst = arith.constant dense<0.000000e+00> : vector<8xf32>
    %2 = vector.multi_reduction <add>, %1, %cst [1] : vector<8x32xf32> to vector<8xf32>
    %3 = vector.shape_cast %2 : vector<8xf32> to vector<8x1xf32>
    %4 = math.sqrt %3 : vector<8x1xf32>
    %cst_1 = arith.constant 9.99999996E-13 : f32
    %5 = vector.broadcast %cst_1 : f32 to vector<8x1xf32>
    %6 = arith.maximumf %4, %5 : vector<8x1xf32>
    %7 = vector.broadcast %6 : vector<8x1xf32> to vector<8x32xf32>
    %8 = arith.divf %0, %7 : vector<8x32xf32>
    %cst_2 = arith.constant dense<0.000000e+00> : vector<32xf32>
    %9 = vector.multi_reduction <add>, %8, %cst_2 [0] : vector<8x32xf32> to vector<32xf32>
    %10 = vector.shape_cast %9 : vector<32xf32> to vector<1x32xf32>
    %cst_3 = arith.constant dense<0.000000e+00> : vector<1x8xf32>
    %11 = tpu.matmul %10, %8, %cst_3 {dimension_numbers = #tpu.dot_dimension_numbers<[1], [1], [0], [0], [0, 0, 1, 0], [], []>} : vector<1x32xf32>, vector<8x32xf32>, vector<1x8xf32> -> vector<1x8xf32>
    %c0_4 = arith.constant 0 : index
    %c0_5 = arith.constant 0 : index
    %12 = vector.load %arg2[%c0_4, %c0_5] : memref<1x8xf32, #tpu.memory_space<vmem>>, vector<1x8xf32>
    tpu.vector_store %arg2[%c0_4, %c0_5], %11 {strides = array<i32>} : memref<1x8xf32, #tpu.memory_space<vmem>>, vector<1x8xf32>,
    return
  }
  func.func @transform_0(%arg0: i32) -> (i32, i32) {
    %c0_i32 = arith.constant 0 : i32
    %c0_i32_0 = arith.constant 0 : i32
    %c0_i32_1 = arith.constant 0 : i32
    return %c0_i32, %c0_i32_0 : i32, i32
  }
  func.func @transform_1(%arg0: i32) -> (i32, i32) {
    %c0_i32 = arith.constant 0 : i32
    %c0_i32_0 = arith.constant 0 : i32
    %c0_i32_1 = arith.constant 0 : i32
    return %c0_i32, %c0_i32_0 : i32, i32
  }
}

</mosaic_0001>

<llo_original>
// kernel: tpu_custom_call.1
$region0: #{tpu_custom_call.1}
  #allocation0 [shape = 'u32[]', space=smem, size = 0x4, offset = 0x4, fixed_abs, tag = 'smem constant byte address 0x4 - core index']
  #allocation1 [shape = 'u32[72,128]{1,0:T(1,128)}', space=vmem, size = 0x9000, scoped, tag = 'internal scratch']
  %s0 = inlined_call_operand.hbm [shape: f32[8,32], index: 0, kind: input, shape index: {}]
  %s1 = inlined_call_operand.hbm [shape: f32[1,8], index: 1, kind: output, shape index: {}]
  %s2 = sld [smem:[#allocation0]]
  $region18: #{tpu_custom_call.1} parent=0
    _
  %s4 = ssub.s32 1, %s2
  %s5 = scalar_select 0, %s4, %s2
  $region1: #{tpu_custom_call.1} parent=0
    #allocation2 [shape = 'u8[4096]{0}', space=vmem, size = 0x1000, scoped, tag = 'input window, operand 0, single buffered']
    #allocation3 [shape = 's32[1]{0}', space=sflag, size = 0x4, scoped, tag = 'scoped memory for tpu_custom_call.1']
    #allocation4 [shape = 's32[1]{0}', space=sflag, size = 0x4, scoped, tag = 'scoped memory for tpu_custom_call.1']
    #allocation5 [shape = 'u8[512]{0}', space=vmem, size = 0x400, scoped, tag = 'output window, operand 0, single buffered']
    %6 = vsyncpa [#allocation3], 0
    %7 = vsyncpa [#allocation4], 0
    // Predicated region
    $region2: #{tpu_custom_call.1} parent=1 // pred_check
      _
    $region3: #{tpu_custom_call.1} parent=1 // pred_check_branch
      %9 = sbr.rel (0) target = $region5
    $region4: #{tpu_custom_call.1} parent=1 // pred_region
      %11 = vsyncadd [#allocation3], 0
      %s13 = sshll.u32 %s0, 4
      %s14 = int_to_ptr.hbm [resolvable:$true] %s13
      %s15 = sshll.u32 [#allocation2], 4
      %s16 = int_to_ptr.vmem [resolvable:$true] %s15
      %18 = dma.hbm_to_vmem [thread:$0]  %s14, 128, %s16, [#allocation3]
    $region5: #{tpu_custom_call.1} parent=1 // pred_fallthru
      _
    // Predicated region
    $region6: #{tpu_custom_call.1} parent=1 // pred_check
      _
    $region7: #{tpu_custom_call.1} parent=1 // pred_check_branch
      %20 = sbr.rel (0) target = $region9
    $region8: #{tpu_custom_call.1} parent=1 // pred_region
      %22 = dma.done [#allocation3], 128
    $region9: #{tpu_custom_call.1} parent=1 // pred_fallthru
      _
    %v23 = vld [vmem:[#allocation2] sm:$0xff]
    %v24 = vmul.f32 %v23, %v23
    %vm25 = vcmask 261120
    %v26 = vsel %vm25, %v24, 0.0
    %27 = vadd.xlane.f32.xlu0 %v26
    %v28 = vpop.xlane.xlu0 %27
    %v29 = vrsqrt.pop %v28
    %v30 = vmul.f32 %v29, %v28
    %v31 = vmul.f32 %v30, %v29
    %v32 = vmul.f32 0.5, %v31
    %v33 = vsub.f32 1.5, %v32
    %v34 = vmul.f32 %v29, %v33
    %v35 = vmul.f32 %v28, %v34
    %vm36 = vcmp.eq.f32.partialorder %v28, inf
    %v37 = vsel %vm36, %v28, %v35
    %vm38 = vcmp.eq.f32.partialorder %v28, 0.0
    %v39 = vand.u32 %v28, 2147483648
    %v40 = vsel %vm38, %v39, %v37
    %v41 = vmax.f32 %v40, 1e-12
    %v42 = vrcp.pop %v41
    %v43 = vmul.f32 %v41, %v42
    %v44 = vsub.f32 1.0, %v43
    %v45 = vmul.f32 %v42, %v44
    %v46 = vadd.f32 %v42, %v45
    %vm47 = vweird.f32 %v41
    %vm48 = vweird.f32 %v42
    %vm49 = vmor %vm47, %vm48
    %v50 = vsel %vm49, %v42, %v46
    %v51 = vand.u32 2147483647, %v41
    %vm52 = vcmp.eq.f32.partialorder %v51, 8.507059e+37
    %v53 = vand.u32 %v41, 2147483648
    %v54 = vor.u32 1.1754944e-38, %v53
    %v55 = vsel %vm52, %v54, %v50
    %v56 = vmul.f32 %v23, %v55
    %v57 = vsel %vm25, %v56, 0.0
    %v58 = vrot.slane %v57, 4
    %v59 = vadd.f32 %v57, %v58
    %v60 = vrot.slane %v59, 2
    %v61 = vadd.f32 %v59, %v60
    %v62 = vrot.slane %v61, 1
    %v63 = vadd.f32 %v61, %v62
    %v65 = vsel %vm25, %v63, 0
    %v68 = vsel %vm25, %v56, 0
    %70 = vmatpush.xpose.msra.mxu0 0.0
    %71 = vmatpush.xpose.msra.mxu0 0.0
    %72 = vmatpush.xpose.msra.mxu0 0.0
    %73 = vmatpush.xpose.msra.mxu0 0.0
    %74 = vmatpush.xpose.msra.mxu0 0.0
    %75 = vmatpush.xpose.msra.mxu0 0.0
    %76 = vmatpush.xpose.msra.mxu0 0.0
    %77 = vmatpush.xpose.msra.mxu0 0.0
    %78 = vmatpush.xpose.msra.mxu0 0.0
    %79 = vmatpush.xpose.msra.mxu0 0.0
    %80 = vmatpush.xpose.msra.mxu0 0.0
    %81 = vmatpush.xpose.msra.mxu0 0.0
    %82 = vmatpush.xpose.msra.mxu0 0.0
    %83 = vmatpush.xpose.msra.mxu0 0.0
    %84 = vmatpush.xpose.msra.mxu0 0.0
    %85 = vmatpush.xpose.msra.mxu0 %v68
    %86 = vmatmul.f32.gmra.mxu0 %v65
    %v87 = vpop.f32.mrf.mxu0
    %v88 = vadd.f32 0.0, %v87
    %89 = vdwg.mxu0
    %vm90 = vcmask 57344
    %91 = vst.msk [vmem:[#allocation5] sm:$0x1] %vm90, %v88
    // Predicated region
    $region10: #{tpu_custom_call.1} parent=1 // pred_check
      _
    $region11: #{tpu_custom_call.1} parent=1 // pred_check_branch
      %93 = sbr.rel (0) target = $region13
    $region12: #{tpu_custom_call.1} parent=1 // pred_region
      %95 = vsyncadd [#allocation4], 0
      %s97 = sshll.u32 [#allocation5], 4
      %s98 = int_to_ptr.vmem [resolvable:$true] %s97
      %s99 = sshll.u32 %s1, 4
      %s100 = int_to_ptr.hbm [resolvable:$true] %s99
      %102 = dma.vmem_to_hbm [thread:$0]  %s98, 16, %s100, [#allocation4]
    $region13: #{tpu_custom_call.1} parent=1 // pred_fallthru
      _
    // Predicated region
    $region14: #{tpu_custom_call.1} parent=1 // pred_check
      _
    $region15: #{tpu_custom_call.1} parent=1 // pred_check_branch
      %104 = sbr.rel (0) target = $region17
    $region16: #{tpu_custom_call.1} parent=1 // pred_region
      %106 = dma.done [#allocation4], 16
    $region17: #{tpu_custom_call.1} parent=1 // pred_fallthru
      _
    %107 = vsyncpa [#allocation3], 1
    %108 = vsyncpa [#allocation4], 1

</llo_original>
